<compile_context>
chip_gen: v7x
topology: tpu7x:2x2x1
jax: 0.10.0
libtpu: 0.0.40
codegen_flags: <defaults>
</compile_context>

<pallas_src>
import jax
import jax.numpy as jnp
from jax import lax
from jax.experimental import pallas as pl
from jax.experimental.pallas import tpu as pltpu


def _round_up(v, m):
    return (v + m - 1) // m * m


def _scaled_linear_kernel(scale_ref, x_ref, w_ref, o_ref):
    # scale_ref: (1, 1) f32 in SMEM
    # x_ref:     (tm, F)  VMEM   (batch tile, full feature dim)
    # w_ref:     (tn, F)  VMEM   (class tile, full feature dim) — PyTorch layout
    # o_ref:     (tm, tn) VMEM
    #
    # Contract the feature dims directly ((tm,F) x (tn,F) -> (tm,tn)); this is
    # the native "trans_b" MXU lowering, so no weight transpose is
    # materialized per tile.  (If a bundle dump ever shows a vxpose here,
    # pre-relayout the static weight to (F, C) once at parameter load.)
    acc = lax.dot_general(
        x_ref[...], w_ref[...],
        dimension_numbers=(((1,), (1,)), ((), ())),
        preferred_element_type=jnp.float32,
        precision=lax.Precision.HIGHEST,
    )
    # Epilogue: apply the scalar once on the (tm, tn) result (VPU), then store.
    o_ref[...] = (scale_ref[0, 0] * acc).astype(o_ref.dtype)


def linear_classifier_forward(x, weight, scale):
    """x: (B, F), weight: (C, F) (PyTorch nn.Linear layout), scale: scalar.

    Computes scale * (x @ weight.T) == fc(scale * x) with bias=False.
    """
    B, F = x.shape
    C, Fw = weight.shape
    assert F == Fw, "feature dims must match"

    out_dtype = x.dtype
    x_item = jnp.dtype(x.dtype).itemsize
    w_item = jnp.dtype(weight.dtype).itemsize
    o_item = jnp.dtype(out_dtype).itemsize

    # ---- M (batch) tiling: balanced tile, >=2 tiles when batch allows so both
    # v7x TensorCores get work; tm is a multiple of 8 whenever there is >1 tile.
    if B <= 16:
        m_tiles = 1
    else:
        m_tiles = max(2, pl.cdiv(B, 256))
    tm = B if m_tiles == 1 else _round_up(pl.cdiv(B, m_tiles), 8)
    m_grid = pl.cdiv(B, tm)

    # ---- N (class) tiling: keep the whole weight resident in VMEM when it
    # fits a comfortable (double-buffered) budget; otherwise 128-lane tiles.
    if 2 * C * F * w_item <= 12 * 1024 * 1024:
        tn = C                      # weight-resident: W DMA'd once, reused per M tile
    else:
        tn = 128 if C > 128 else C  # lane-aligned class tiles
    n_grid = pl.cdiv(C, tn)

    # ---- VMEM budget: actual double-buffered working set, clamped to a range
    # that is safe on every generation (v7x physical VMEM is 64 MiB).
    working_set = 2 * (tm * F * x_item + tn * F * w_item + tm * tn * o_item)
    vmem_limit = int(min(48 * 1024 * 1024, max(8 * 1024 * 1024, 2 * working_set)))

    scale_arr = jnp.reshape(jnp.asarray(scale, dtype=jnp.float32), (1, 1))

    cost = pl.CostEstimate(
        flops=2 * B * F * C,
        transcendentals=0,
        bytes_accessed=B * F * x_item + C * F * w_item + B * C * o_item,
    )

    return pl.pallas_call(
        _scaled_linear_kernel,
        out_shape=jax.ShapeDtypeStruct((B, C), out_dtype),
        grid=(m_grid, n_grid),
        in_specs=[
            pl.BlockSpec(memory_space=pltpu.MemorySpace.SMEM),   # scale (1,1)
            pl.BlockSpec((tm, F), lambda i, j: (i, 0)),          # x batch tile, full K
            pl.BlockSpec((tn, F), lambda i, j: (j, 0)),          # weight tile, full K
        ],
        out_specs=pl.BlockSpec((tm, tn), lambda i, j: (i, j)),
        compiler_params=pltpu.CompilerParams(
            dimension_semantics=("parallel", "parallel"),
            vmem_limit_bytes=vmem_limit,
        ),
        cost_estimate=cost,
    )(scale_arr, x, weight)


if __name__ == "__main__":
    # Small shapes consistent with the module: feature_dim=32, num_class=16, batch=8.
    B, FEAT, NCLS = 8, 32, 16

    key = jax.random.PRNGKey(0)
    kx, kw = jax.random.split(key)

    x = jax.random.normal(kx, (B, FEAT), dtype=jnp.float32)
    # nn.Linear(feature_dim, num_class, bias=False).weight has shape (num_class, feature_dim)
    weight = jax.random.normal(kw, (NCLS, FEAT), dtype=jnp.float32) * (1.0 / FEAT ** 0.5)
    # nn.Parameter(torch.FloatTensor([10])) -> scalar init 10.0
    scale = jnp.float32(10.0)

    logits = linear_classifier_forward(x, weight, scale)
    logits = jax.block_until_ready(logits)

    # Reference check in plain JAX
    ref = (scale * x) @ weight.T
    assert logits.shape == (B, NCLS)
    assert jnp.allclose(logits, ref, atol=1e-3, rtol=1e-3), float(
        jnp.max(jnp.abs(logits - ref)))

    print("KERNEL_OK")
</pallas_src>

<mosaic_0001>
module attributes {stable_mosaic.version = 11 : i64} {
  func.func @_scaled_linear_kernel(%arg0: i32, %arg1: i32, %arg2: memref<1x1xf32, #tpu.memory_space<smem>>, %arg3: memref<8x32xf32, #tpu.memory_space<vmem>>, %arg4: memref<16x32xf32, #tpu.memory_space<vmem>>, %arg5: memref<8x16xf32, #tpu.memory_space<vmem>>) attributes {dimension_semantics = [#tpu.dimension_semantics<parallel>, #tpu.dimension_semantics<parallel>], iteration_bounds = array<i64: 1, 1>, scalar_prefetch = 0 : i64, scratch_operands = 0 : i64, tpu.core_type = #tpu.core_type<tc>, window_params = [{transform_indices = @transform_0, window_bounds = array<i64: 1, 1>}, {transform_indices = @transform_1, window_bounds = array<i64: 8, 32>}, {transform_indices = @transform_2, window_bounds = array<i64: 16, 32>}, {transform_indices = @transform_3, window_bounds = array<i64: 8, 16>}]} {
    %c0 = arith.constant 0 : index
    %c0_0 = arith.constant 0 : index
    %0 = vector.load %arg3[%c0, %c0_0] : memref<8x32xf32, #tpu.memory_space<vmem>>, vector<8x32xf32>
    %c0_1 = arith.constant 0 : index
    %c0_2 = arith.constant 0 : index
    %1 = vector.load %arg4[%c0_1, %c0_2] : memref<16x32xf32, #tpu.memory_space<vmem>>, vector<16x32xf32>
    %cst = arith.constant dense<0.000000e+00> : vector<8x16xf32>
    %2 = tpu.matmul %0, %1, %cst {dimension_numbers = #tpu.dot_dimension_numbers<[1], [1], [0], [0], [0, 0, 1, 0], [], []>, precision = #tpu.contract_precision<fp32>} : vector<8x32xf32>, vector<16x32xf32>, vector<8x16xf32> -> vector<8x16xf32>
    %c0_3 = arith.constant 0 : index
    %c0_4 = arith.constant 0 : index
    %3 = memref.load %arg2[%c0_3, %c0_4] : memref<1x1xf32, #tpu.memory_space<smem>>
    %4 = vector.broadcast %3 : f32 to vector<8x16xf32>
    %5 = arith.mulf %4, %2 : vector<8x16xf32>
    %c0_5 = arith.constant 0 : index
    %c0_6 = arith.constant 0 : index
    %6 = vector.load %arg5[%c0_5, %c0_6] : memref<8x16xf32, #tpu.memory_space<vmem>>, vector<8x16xf32>
    tpu.vector_store %arg5[%c0_5, %c0_6], %5 {strides = array<i32>} : memref<8x16xf32, #tpu.memory_space<vmem>>, vector<8x16xf32>,
    return
  }
  func.func @transform_0(%arg0: i32, %arg1: i32) -> (i32, i32) {
    %c0_i32 = arith.constant 0 : i32
    %c0_i32_0 = arith.constant 0 : i32
    %c0_i32_1 = arith.constant 0 : i32
    return %c0_i32, %c0_i32_0 : i32, i32
  }
  func.func @transform_1(%arg0: i32, %arg1: i32) -> (i32, i32) {
    %c0_i32 = arith.constant 0 : i32
    %c0_i32_0 = arith.constant 0 : i32
    return %arg0, %c0_i32 : i32, i32
  }
  func.func @transform_2(%arg0: i32, %arg1: i32) -> (i32, i32) {
    %c0_i32 = arith.constant 0 : i32
    %c0_i32_0 = arith.constant 0 : i32
    return %arg1, %c0_i32 : i32, i32
  }
  func.func @transform_3(%arg0: i32, %arg1: i32) -> (i32, i32) {
    %c0_i32 = arith.constant 0 : i32
    return %arg0, %arg1 : i32, i32
  }
}

</mosaic_0001>

<llo_original>
// kernel: tpu_custom_call.1
$region0: #{tpu_custom_call.1}
  #allocation0 [shape = 'u32[]', space=smem, size = 0x4, offset = 0x4, fixed_abs, tag = 'smem constant byte address 0x4 - core index']
  #allocation1 [shape = 'u32[144,128]{1,0:T(1,128)}', space=vmem, size = 0x12000, scoped, tag = 'internal scratch']
  #allocation2 [shape = 'f32[1,1]{1,0:T(1,128)S(6)}', space=smem, size = 0x200, scoped, tag = 'scoped memory for tpu_custom_call.1']
  %s0 = inlined_call_operand.<no memory space> [shape: f32[1,1], index: 0, kind: input, shape index: {}]
  %s1 = inlined_call_operand.hbm [shape: f32[8,32], index: 1, kind: input, shape index: {}]
  %s2 = inlined_call_operand.hbm [shape: f32[16,32], index: 2, kind: input, shape index: {}]
  %s3 = inlined_call_operand.hbm [shape: f32[8,16], index: 3, kind: output, shape index: {}]
  %s4 = sld [smem:[#allocation0]]
  $region30: #{tpu_custom_call.1} parent=0
    _
  %s6 = ssub.s32 1, %s4
  %s7 = scalar_select 0, %s6, %s4
  %8 = sst [smem:[#allocation2]] %s0
  $region1: #{tpu_custom_call.1} parent=0
    #allocation3 [shape = 'u8[4096]{0}', space=vmem, size = 0x1000, scoped, tag = 'input window, operand 1, single buffered']
    #allocation4 [shape = 's32[1]{0}', space=sflag, size = 0x4, scoped, tag = 'scoped memory for tpu_custom_call.1']
    #allocation5 [shape = 's32[1]{0}', space=sflag, size = 0x4, scoped, tag = 'scoped memory for tpu_custom_call.1']
    #allocation6 [shape = 'u8[8192]{0}', space=vmem, size = 0x2000, scoped, tag = 'input window, operand 2, single buffered']
    #allocation7 [shape = 's32[1]{0}', space=sflag, size = 0x4, scoped, tag = 'scoped memory for tpu_custom_call.1']
    #allocation8 [shape = 'u8[4096]{0}', space=vmem, size = 0x1000, scoped, tag = 'output window, operand 0, single buffered']
    %9 = vsyncpa [#allocation4], 0
    %10 = vsyncpa [#allocation7], 0
    %11 = vsyncpa [#allocation5], 0
    // Predicated region
    $region2: #{tpu_custom_call.1} parent=1 // pred_check
      _
    $region3: #{tpu_custom_call.1} parent=1 // pred_check_branch
      %13 = sbr.rel (0) target = $region5
    $region4: #{tpu_custom_call.1} parent=1 // pred_region
      _
    $region5: #{tpu_custom_call.1} parent=1 // pred_fallthru
      _
    // Predicated region
    $region6: #{tpu_custom_call.1} parent=1 // pred_check
      _
    $region7: #{tpu_custom_call.1} parent=1 // pred_check_branch
      %15 = sbr.rel (0) target = $region9
    $region8: #{tpu_custom_call.1} parent=1 // pred_region
      %s17 = ssub.s32 128, 128
      %18 = vsyncadd [#allocation4], %s17
      %s20 = sshll.u32 [#allocation3], 4
      %s21 = int_to_ptr.vmem [resolvable:$true] %s20
      %23 = dma.hbm_to_vmem [thread:$0]  %s1, 128, %s21, [#allocation4]
    $region9: #{tpu_custom_call.1} parent=1 // pred_fallthru
      _
    // Predicated region
    $region10: #{tpu_custom_call.1} parent=1 // pred_check
      _
    $region11: #{tpu_custom_call.1} parent=1 // pred_check_branch
      %25 = sbr.rel (0) target = $region13
    $region12: #{tpu_custom_call.1} parent=1 // pred_region
      %s27 = ssub.s32 256, 256
      %28 = vsyncadd [#allocation7], %s27
      %s29 = sshll.u32 [#allocation6], 4
      %s30 = int_to_ptr.vmem [resolvable:$true] %s29
      %35 = dma.hbm_to_vmem [thread:$0]  %s2, 256, %s30, [#allocation7], 128, 128, 8
    $region13: #{tpu_custom_call.1} parent=1 // pred_fallthru
      _
    // Predicated region
    $region14: #{tpu_custom_call.1} parent=1 // pred_check
      _
    $region15: #{tpu_custom_call.1} parent=1 // pred_check_branch
      %37 = sbr.rel (0) target = $region17
    $region16: #{tpu_custom_call.1} parent=1 // pred_region
      %38 = dma.done [#allocation4], 128
    $region17: #{tpu_custom_call.1} parent=1 // pred_fallthru
      _
    // Predicated region
    $region18: #{tpu_custom_call.1} parent=1 // pred_check
      _
    $region19: #{tpu_custom_call.1} parent=1 // pred_check_branch
      %40 = sbr.rel (0) target = $region21
    $region20: #{tpu_custom_call.1} parent=1 // pred_region
      %41 = dma.done [#allocation7], 256
    $region21: #{tpu_custom_call.1} parent=1 // pred_fallthru
      _
    %v42 = vld [vmem:[#allocation3] sm:$0xff]
    %v43 = vld [vmem:[#allocation6] sm:$0xff]
    %v44 = vld [vmem:[#allocation6 + $0x8] sm:$0xff]
    %vm45 = vcmask 261120
    %v47 = vsel %vm45, %v42, 0
    %v50 = vsel %vm45, %v43, 0
    %v53 = vsel %vm45, %v44, 0
    %55 = vmatprep.subr.mxu0 0.0
    %v56 = vand.u32 %v50, 4294901760
    %57 = vmatpush1.xpose.msra.mxu0 %v56
    %58 = vmatprep.subr.mxu0 0.0
    %v59 = vand.u32 %v53, 4294901760
    %60 = vmatpush1.xpose.msra.mxu0 %v59
    %61 = vmatprep.subr.mxu0 0.0
    %62 = vmatpush1.xpose.msra.mxu0 0.0
    %63 = vmatprep.subr.mxu0 0.0
    %64 = vmatpush1.xpose.msra.mxu0 0.0
    %65 = vmatprep.subr.mxu0 0.0
    %66 = vmatpush1.xpose.msra.mxu0 0.0
    %67 = vmatprep.subr.mxu0 0.0
    %68 = vmatpush1.xpose.msra.mxu0 0.0
    %69 = vmatprep.subr.mxu0 0.0
    %70 = vmatpush1.xpose.msra.mxu0 0.0
    %71 = vmatprep.subr.mxu0 0.0
    %72 = vmatpush1.xpose.msra.mxu0 0.0
    %73 = vmatprep.subr.mxu0 0.0
    %74 = vmatpush1.xpose.msra.mxu0 0.0
    %75 = vmatprep.subr.mxu0 0.0
    %76 = vmatpush1.xpose.msra.mxu0 0.0
    %77 = vmatprep.subr.mxu0 0.0
    %78 = vmatpush1.xpose.msra.mxu0 0.0
    %79 = vmatprep.subr.mxu0 0.0
    %80 = vmatpush1.xpose.msra.mxu0 0.0
    %81 = vmatprep.subr.mxu0 0.0
    %82 = vmatpush1.xpose.msra.mxu0 0.0
    %83 = vmatprep.subr.mxu0 0.0
    %84 = vmatpush1.xpose.msra.mxu0 0.0
    %85 = vmatprep.subr.mxu0 0.0
    %86 = vmatpush1.xpose.msra.mxu0 0.0
    %87 = vmatprep.subr.mxu0 0.0
    %88 = vmatpush1.xpose.msra.mxu0 0.0
    %89 = vmatprep.subr.mxu0 0.0
    %90 = vmatpush1.xpose.msra.mxu0 0.0
    %91 = vmatprep.subr.mxu0 0.0
    %92 = vmatpush1.xpose.msra.mxu0 0.0
    %93 = vmatprep.subr.mxu0 0.0
    %94 = vmatpush1.xpose.msra.mxu0 0.0
    %95 = vmatprep.subr.mxu0 0.0
    %96 = vmatpush1.xpose.msra.mxu0 0.0
    %97 = vmatprep.subr.mxu0 0.0
    %98 = vmatpush1.xpose.msra.mxu0 0.0
    %99 = vmatprep.subr.mxu0 0.0
    %100 = vmatpush1.xpose.msra.mxu0 0.0
    %101 = vmatprep.subr.mxu0 0.0
    %102 = vmatpush1.xpose.msra.mxu0 0.0
    %103 = vmatprep.subr.mxu0 0.0
    %104 = vmatpush1.xpose.msra.mxu0 0.0
    %105 = vmatprep.subr.mxu0 0.0
    %106 = vmatpush1.xpose.msra.mxu0 0.0
    %107 = vmatprep.subr.mxu0 0.0
    %108 = vmatpush1.xpose.msra.mxu0 0.0
    %109 = vmatprep.subr.mxu0 0.0
    %110 = vmatpush1.xpose.msra.mxu0 0.0
    %111 = vmatprep.subr.mxu0 0.0
    %112 = vmatpush1.xpose.msra.mxu0 0.0
    %113 = vmatprep.subr.mxu0 0.0
    %114 = vmatpush1.xpose.msra.mxu0 0.0
    %115 = vmatprep.subr.mxu0 0.0
    %116 = vmatpush1.xpose.msra.mxu0 0.0
    %117 = vmatprep.subr.mxu0 0.0
    %118 = vmatpush1.xpose.msra.mxu0 0.0
    %119 = vmatprep.subr.mxu0 0.0
    %120 = vmatpush1.xpose.msra.mxu0 0.0
    %121 = vmatprep.mubr.f32.mxu0 0.0
    %v122 = vand.u32 %v47, 4294901760
    %v123 = vsub.f32 %v47, %v122
    %v124 = vand.u32 %v123, 4294901760
    %v125 = vsub.f32 %v123, %v124
    %v126 = vand.u32 %v125, 4294901760
    %127 = vmatmul.mubr.f32.gmra.mrb[0].mxu0 %v126
    %v128 = vpop.f32.mrb[0].mxu0
    %v129 = vadd.f32 0.0, %v128
    %v130 = vpop.f32.mrb[0].mxu0
    %131 = vdwg.mxu0
    %132 = vmatprep.subr.mxu0 0.0
    %v133 = vand.u32 %v50, 4294901760
    %v134 = vsub.f32 %v50, %v133
    %v135 = vand.u32 %v134, 4294901760
    %v136 = vsub.f32 %v134, %v135
    %v137 = vand.u32 %v136, 4294901760
    %138 = vmatpush1.xpose.msra.mxu0 %v137
    %139 = vmatprep.subr.mxu0 0.0
    %v140 = vand.u32 %v53, 4294901760
    %v141 = vsub.f32 %v53, %v140
    %v142 = vand.u32 %v141, 4294901760
    %v143 = vsub.f32 %v141, %v142
    %v144 = vand.u32 %v143, 4294901760
    %145 = vmatpush1.xpose.msra.mxu0 %v144
    %146 = vmatprep.subr.mxu0 0.0
    %147 = vmatpush1.xpose.msra.mxu0 0.0
    %148 = vmatprep.subr.mxu0 0.0
    %149 = vmatpush1.xpose.msra.mxu0 0.0
    %150 = vmatprep.subr.mxu0 0.0
    %151 = vmatpush1.xpose.msra.mxu0 0.0
    %152 = vmatprep.subr.mxu0 0.0
    %153 = vmatpush1.xpose.msra.mxu0 0.0
    %154 = vmatprep.subr.mxu0 0.0
    %155 = vmatpush1.xpose.msra.mxu0 0.0
    %156 = vmatprep.subr.mxu0 0.0
    %157 = vmatpush1.xpose.msra.mxu0 0.0
    %158 = vmatprep.subr.mxu0 0.0
    %159 = vmatpush1.xpose.msra.mxu0 0.0
    %160 = vmatprep.subr.mxu0 0.0
    %161 = vmatpush1.xpose.msra.mxu0 0.0
    %162 = vmatprep.subr.mxu0 0.0
    %163 = vmatpush1.xpose.msra.mxu0 0.0
    %164 = vmatprep.subr.mxu0 0.0
    %165 = vmatpush1.xpose.msra.mxu0 0.0
    %166 = vmatprep.subr.mxu0 0.0
    %167 = vmatpush1.xpose.msra.mxu0 0.0
    %168 = vmatprep.subr.mxu0 0.0
    %169 = vmatpush1.xpose.msra.mxu0 0.0
    %170 = vmatprep.subr.mxu0 0.0
    %171 = vmatpush1.xpose.msra.mxu0 0.0
    %172 = vmatprep.subr.mxu0 0.0
    %173 = vmatpush1.xpose.msra.mxu0 0.0
    %174 = vmatprep.subr.mxu0 0.0
    %175 = vmatpush1.xpose.msra.mxu0 0.0
    %176 = vmatprep.subr.mxu0 0.0
    %177 = vmatpush1.xpose.msra.mxu0 0.0
    %178 = vmatprep.subr.mxu0 0.0
    %179 = vmatpush1.xpose.msra.mxu0 0.0
    %180 = vmatprep.subr.mxu0 0.0
    %181 = vmatpush1.xpose.msra.mxu0 0.0
    %182 = vmatprep.subr.mxu0 0.0
    %183 = vmatpush1.xpose.msra.mxu0 0.0
    %184 = vmatprep.subr.mxu0 0.0
    %185 = vmatpush1.xpose.msra.mxu0 0.0
    %186 = vmatprep.subr.mxu0 0.0
    %187 = vmatpush1.xpose.msra.mxu0 0.0
    %188 = vmatprep.subr.mxu0 0.0
    %189 = vmatpush1.xpose.msra.mxu0 0.0
    %190 = vmatprep.subr.mxu0 0.0
    %191 = vmatpush1.xpose.msra.mxu0 0.0
    %192 = vmatprep.subr.mxu0 0.0
    %193 = vmatpush1.xpose.msra.mxu0 0.0
    %194 = vmatprep.subr.mxu0 0.0
    %195 = vmatpush1.xpose.msra.mxu0 0.0
    %196 = vmatprep.subr.mxu0 0.0
    %197 = vmatpush1.xpose.msra.mxu0 0.0
    %198 = vmatprep.subr.mxu0 0.0
    %199 = vmatpush1.xpose.msra.mxu0 0.0
    %200 = vmatprep.subr.mxu0 0.0
    %201 = vmatpush1.xpose.msra.mxu0 0.0
    %202 = vmatprep.subr.mxu0 0.0
    %203 = vmatpush1.xpose.msra.mxu0 0.0
    %204 = vmatprep.subr.mxu0 0.0
    %205 = vmatpush1.xpose.msra.mxu0 0.0
    %206 = vmatprep.mubr.f32.mxu0 0.0
    %v207 = vand.u32 %v47, 4294901760
    %208 = vmatmul.mubr.f32.gmra.mrb[0].mxu0 %v207
    %v209 = vpop.f32.mrb[0].mxu0
    %v210 = vadd.f32 %v129, %v209
    %v211 = vpop.f32.mrb[0].mxu0
    %212 = vdwg.mxu0
    %213 = vmatprep.subr.mxu0 0.0
    %v214 = vand.u32 %v50, 4294901760
    %v215 = vsub.f32 %v50, %v214
    %216 = vmatpush1.xpose.msra.mxu0 %v215
    %217 = vmatprep.subr.mxu0 0.0
    %v218 = vand.u32 %v53, 4294901760
    %v219 = vsub.f32 %v53, %v218
    %220 = vmatpush1.xpose.msra.mxu0 %v219
    %221 = vmatprep.subr.mxu0 0.0
    %222 = vmatpush1.xpose.msra.mxu0 0.0
    %223 = vmatprep.subr.mxu0 0.0
    %224 = vmatpush1.xpose.msra.mxu0 0.0
    %225 = vmatprep.subr.mxu0 0.0
    %226 = vmatpush1.xpose.msra.mxu0 0.0
    %227 = vmatprep.subr.mxu0 0.0
    %228 = vmatpush1.xpose.msra.mxu0 0.0
    %229 = vmatprep.subr.mxu0 0.0
    %230 = vmatpush1.xpose.msra.mxu0 0.0
    %231 = vmatprep.subr.mxu0 0.0
    %232 = vmatpush1.xpose.msra.mxu0 0.0
    %233 = vmatprep.subr.mxu0 0.0
    %234 = vmatpush1.xpose.msra.mxu0 0.0
    %235 = vmatprep.subr.mxu0 0.0
    %236 = vmatpush1.xpose.msra.mxu0 0.0
    %237 = vmatprep.subr.mxu0 0.0
    %238 = vmatpush1.xpose.msra.mxu0 0.0
    %239 = vmatprep.subr.mxu0 0.0
    %240 = vmatpush1.xpose.msra.mxu0 0.0
    %241 = vmatprep.subr.mxu0 0.0
    %242 = vmatpush1.xpose.msra.mxu0 0.0
    %243 = vmatprep.subr.mxu0 0.0
    %244 = vmatpush1.xpose.msra.mxu0 0.0
    %245 = vmatprep.subr.mxu0 0.0
    %246 = vmatpush1.xpose.msra.mxu0 0.0
    %247 = vmatprep.subr.mxu0 0.0
    %248 = vmatpush1.xpose.msra.mxu0 0.0
    %249 = vmatprep.subr.mxu0 0.0
    %250 = vmatpush1.xpose.msra.mxu0 0.0
    %251 = vmatprep.subr.mxu0 0.0
    %252 = vmatpush1.xpose.msra.mxu0 0.0
    %253 = vmatprep.subr.mxu0 0.0
    %254 = vmatpush1.xpose.msra.mxu0 0.0
    %255 = vmatprep.subr.mxu0 0.0
    %256 = vmatpush1.xpose.msra.mxu0 0.0
    %257 = vmatprep.subr.mxu0 0.0
    %258 = vmatpush1.xpose.msra.mxu0 0.0
    %259 = vmatprep.subr.mxu0 0.0
    %260 = vmatpush1.xpose.msra.mxu0 0.0
    %261 = vmatprep.subr.mxu0 0.0
    %262 = vmatpush1.xpose.msra.mxu0 0.0
    %263 = vmatprep.subr.mxu0 0.0
    %264 = vmatpush1.xpose.msra.mxu0 0.0
    %265 = vmatprep.subr.mxu0 0.0
    %266 = vmatpush1.xpose.msra.mxu0 0.0
    %267 = vmatprep.subr.mxu0 0.0
    %268 = vmatpush1.xpose.msra.mxu0 0.0
    %269 = vmatprep.subr.mxu0 0.0
    %270 = vmatpush1.xpose.msra.mxu0 0.0
    %271 = vmatprep.subr.mxu0 0.0
    %272 = vmatpush1.xpose.msra.mxu0 0.0
    %273 = vmatprep.subr.mxu0 0.0
    %274 = vmatpush1.xpose.msra.mxu0 0.0
    %275 = vmatprep.subr.mxu0 0.0
    %276 = vmatpush1.xpose.msra.mxu0 0.0
    %277 = vmatprep.subr.mxu0 0.0
    %278 = vmatpush1.xpose.msra.mxu0 0.0
    %279 = vmatprep.subr.mxu0 0.0
    %280 = vmatpush1.xpose.msra.mxu0 0.0
    %281 = vmatprep.mubr.f32.mxu0 0.0
    %v282 = vand.u32 %v47, 4294901760
    %v283 = vsub.f32 %v47, %v282
    %284 = vmatmul.mubr.f32.gmra.mrb[0].mxu0 %v283
    %v285 = vpop.f32.mrb[0].mxu0
    %v286 = vadd.f32 %v210, %v285
    %v287 = vpop.f32.mrb[0].mxu0
    %288 = vdwg.mxu0
    %289 = vmatprep.subr.mxu0 0.0
    %v290 = vand.u32 %v50, 4294901760
    %291 = vmatpush1.xpose.msra.mxu0 %v290
    %292 = vmatprep.subr.mxu0 0.0
    %v293 = vand.u32 %v53, 4294901760
    %294 = vmatpush1.xpose.msra.mxu0 %v293
    %295 = vmatprep.subr.mxu0 0.0
    %296 = vmatpush1.xpose.msra.mxu0 0.0
    %297 = vmatprep.subr.mxu0 0.0
    %298 = vmatpush1.xpose.msra.mxu0 0.0
    %299 = vmatprep.subr.mxu0 0.0
    %300 = vmatpush1.xpose.msra.mxu0 0.0
    %301 = vmatprep.subr.mxu0 0.0
    %302 = vmatpush1.xpose.msra.mxu0 0.0
    %303 = vmatprep.subr.mxu0 0.0
    %304 = vmatpush1.xpose.msra.mxu0 0.0
    %305 = vmatprep.subr.mxu0 0.0
    %306 = vmatpush1.xpose.msra.mxu0 0.0
    %307 = vmatprep.subr.mxu0 0.0
    %308 = vmatpush1.xpose.msra.mxu0 0.0
    %309 = vmatprep.subr.mxu0 0.0
    %310 = vmatpush1.xpose.msra.mxu0 0.0
    %311 = vmatprep.subr.mxu0 0.0
    %312 = vmatpush1.xpose.msra.mxu0 0.0
    %313 = vmatprep.subr.mxu0 0.0
    %314 = vmatpush1.xpose.msra.mxu0 0.0
    %315 = vmatprep.subr.mxu0 0.0
    %316 = vmatpush1.xpose.msra.mxu0 0.0
    %317 = vmatprep.subr.mxu0 0.0
    %318 = vmatpush1.xpose.msra.mxu0 0.0
    %319 = vmatprep.subr.mxu0 0.0
    %320 = vmatpush1.xpose.msra.mxu0 0.0
    %321 = vmatprep.subr.mxu0 0.0
    %322 = vmatpush1.xpose.msra.mxu0 0.0
    %323 = vmatprep.subr.mxu0 0.0
    %324 = vmatpush1.xpose.msra.mxu0 0.0
    %325 = vmatprep.subr.mxu0 0.0
    %326 = vmatpush1.xpose.msra.mxu0 0.0
    %327 = vmatprep.subr.mxu0 0.0
    %328 = vmatpush1.xpose.msra.mxu0 0.0
    %329 = vmatprep.subr.mxu0 0.0
    %330 = vmatpush1.xpose.msra.mxu0 0.0
    %331 = vmatprep.subr.mxu0 0.0
    %332 = vmatpush1.xpose.msra.mxu0 0.0
    %333 = vmatprep.subr.mxu0 0.0
    %334 = vmatpush1.xpose.msra.mxu0 0.0
    %335 = vmatprep.subr.mxu0 0.0
    %336 = vmatpush1.xpose.msra.mxu0 0.0
    %337 = vmatprep.subr.mxu0 0.0
    %338 = vmatpush1.xpose.msra.mxu0 0.0
    %339 = vmatprep.subr.mxu0 0.0
    %340 = vmatpush1.xpose.msra.mxu0 0.0
    %341 = vmatprep.subr.mxu0 0.0
    %342 = vmatpush1.xpose.msra.mxu0 0.0
    %343 = vmatprep.subr.mxu0 0.0
    %344 = vmatpush1.xpose.msra.mxu0 0.0
    %345 = vmatprep.subr.mxu0 0.0
    %346 = vmatpush1.xpose.msra.mxu0 0.0
    %347 = vmatprep.subr.mxu0 0.0
    %348 = vmatpush1.xpose.msra.mxu0 0.0
    %349 = vmatprep.subr.mxu0 0.0
    %350 = vmatpush1.xpose.msra.mxu0 0.0
    %351 = vmatprep.subr.mxu0 0.0
    %352 = vmatpush1.xpose.msra.mxu0 0.0
    %353 = vmatprep.subr.mxu0 0.0
    %354 = vmatpush1.xpose.msra.mxu0 0.0
    %355 = vmatprep.mubr.f32.mxu0 0.0
    %v356 = vand.u32 %v47, 4294901760
    %v357 = vsub.f32 %v47, %v356
    %v358 = vand.u32 %v357, 4294901760
    %359 = vmatmul.mubr.f32.gmra.mrb[0].mxu0 %v358
    %v360 = vpop.f32.mrb[0].mxu0
    %v361 = vadd.f32 %v286, %v360
    %v362 = vpop.f32.mrb[0].mxu0
    %363 = vdwg.mxu0
    %364 = vmatprep.subr.mxu0 0.0
    %v365 = vand.u32 %v50, 4294901760
    %v366 = vsub.f32 %v50, %v365
    %v367 = vand.u32 %v366, 4294901760
    %368 = vmatpush1.xpose.msra.mxu0 %v367
    %369 = vmatprep.subr.mxu0 0.0
    %v370 = vand.u32 %v53, 4294901760
    %v371 = vsub.f32 %v53, %v370
    %v372 = vand.u32 %v371, 4294901760
    %373 = vmatpush1.xpose.msra.mxu0 %v372
    %374 = vmatprep.subr.mxu0 0.0
    %375 = vmatpush1.xpose.msra.mxu0 0.0
    %376 = vmatprep.subr.mxu0 0.0
    %377 = vmatpush1.xpose.msra.mxu0 0.0
    %378 = vmatprep.subr.mxu0 0.0
    %379 = vmatpush1.xpose.msra.mxu0 0.0
    %380 = vmatprep.subr.mxu0 0.0
    %381 = vmatpush1.xpose.msra.mxu0 0.0
    %382 = vmatprep.subr.mxu0 0.0
    %383 = vmatpush1.xpose.msra.mxu0 0.0
    %384 = vmatprep.subr.mxu0 0.0
    %385 = vmatpush1.xpose.msra.mxu0 0.0
    %386 = vmatprep.subr.mxu0 0.0
    %387 = vmatpush1.xpose.msra.mxu0 0.0
    %388 = vmatprep.subr.mxu0 0.0
    %389 = vmatpush1.xpose.msra.mxu0 0.0
    %390 = vmatprep.subr.mxu0 0.0
    %391 = vmatpush1.xpose.msra.mxu0 0.0
    %392 = vmatprep.subr.mxu0 0.0
    %393 = vmatpush1.xpose.msra.mxu0 0.0
    %394 = vmatprep.subr.mxu0 0.0
    %395 = vmatpush1.xpose.msra.mxu0 0.0
    %396 = vmatprep.subr.mxu0 0.0
    %397 = vmatpush1.xpose.msra.mxu0 0.0
    %398 = vmatprep.subr.mxu0 0.0
    %399 = vmatpush1.xpose.msra.mxu0 0.0
    %400 = vmatprep.subr.mxu0 0.0
    %401 = vmatpush1.xpose.msra.mxu0 0.0
    %402 = vmatprep.subr.mxu0 0.0
    %403 = vmatpush1.xpose.msra.mxu0 0.0
    %404 = vmatprep.subr.mxu0 0.0
    %405 = vmatpush1.xpose.msra.mxu0 0.0
    %406 = vmatprep.subr.mxu0 0.0
    %407 = vmatpush1.xpose.msra.mxu0 0.0
    %408 = vmatprep.subr.mxu0 0.0
    %409 = vmatpush1.xpose.msra.mxu0 0.0
    %410 = vmatprep.subr.mxu0 0.0
    %411 = vmatpush1.xpose.msra.mxu0 0.0
    %412 = vmatprep.subr.mxu0 0.0
    %413 = vmatpush1.xpose.msra.mxu0 0.0
    %414 = vmatprep.subr.mxu0 0.0
    %415 = vmatpush1.xpose.msra.mxu0 0.0
    %416 = vmatprep.subr.mxu0 0.0
    %417 = vmatpush1.xpose.msra.mxu0 0.0
    %418 = vmatprep.subr.mxu0 0.0
    %419 = vmatpush1.xpose.msra.mxu0 0.0
    %420 = vmatprep.subr.mxu0 0.0
    %421 = vmatpush1.xpose.msra.mxu0 0.0
    %422 = vmatprep.subr.mxu0 0.0
    %423 = vmatpush1.xpose.msra.mxu0 0.0
    %424 = vmatprep.subr.mxu0 0.0
    %425 = vmatpush1.xpose.msra.mxu0 0.0
    %426 = vmatprep.subr.mxu0 0.0
    %427 = vmatpush1.xpose.msra.mxu0 0.0
    %428 = vmatprep.subr.mxu0 0.0
    %429 = vmatpush1.xpose.msra.mxu0 0.0
    %430 = vmatprep.subr.mxu0 0.0
    %431 = vmatpush1.xpose.msra.mxu0 0.0
    %432 = vmatprep.subr.mxu0 0.0
    %433 = vmatpush1.xpose.msra.mxu0 0.0
    %434 = vmatprep.mubr.f32.mxu0 0.0
    %v435 = vand.u32 %v47, 4294901760
    %436 = vmatmul.mubr.f32.gmra.mrb[0].mxu0 %v435
    %v437 = vpop.f32.mrb[0].mxu0
    %v438 = vadd.f32 %v361, %v437
    %v439 = vpop.f32.mrb[0].mxu0
    %440 = vdwg.mxu0
    %441 = vmatprep.subr.mxu0 0.0
    %v442 = vand.u32 %v50, 4294901760
    %443 = vmatpush1.xpose.msra.mxu0 %v442
    %444 = vmatprep.subr.mxu0 0.0
    %v445 = vand.u32 %v53, 4294901760
    %446 = vmatpush1.xpose.msra.mxu0 %v445
    %447 = vmatprep.subr.mxu0 0.0
    %448 = vmatpush1.xpose.msra.mxu0 0.0
    %449 = vmatprep.subr.mxu0 0.0
    %450 = vmatpush1.xpose.msra.mxu0 0.0
    %451 = vmatprep.subr.mxu0 0.0
    %452 = vmatpush1.xpose.msra.mxu0 0.0
    %453 = vmatprep.subr.mxu0 0.0
    %454 = vmatpush1.xpose.msra.mxu0 0.0
    %455 = vmatprep.subr.mxu0 0.0
    %456 = vmatpush1.xpose.msra.mxu0 0.0
    %457 = vmatprep.subr.mxu0 0.0
    %458 = vmatpush1.xpose.msra.mxu0 0.0
    %459 = vmatprep.subr.mxu0 0.0
    %460 = vmatpush1.xpose.msra.mxu0 0.0
    %461 = vmatprep.subr.mxu0 0.0
    %462 = vmatpush1.xpose.msra.mxu0 0.0
    %463 = vmatprep.subr.mxu0 0.0
    %464 = vmatpush1.xpose.msra.mxu0 0.0
    %465 = vmatprep.subr.mxu0 0.0
    %466 = vmatpush1.xpose.msra.mxu0 0.0
    %467 = vmatprep.subr.mxu0 0.0
    %468 = vmatpush1.xpose.msra.mxu0 0.0
    %469 = vmatprep.subr.mxu0 0.0
    %470 = vmatpush1.xpose.msra.mxu0 0.0
    %471 = vmatprep.subr.mxu0 0.0
    %472 = vmatpush1.xpose.msra.mxu0 0.0
    %473 = vmatprep.subr.mxu0 0.0
    %474 = vmatpush1.xpose.msra.mxu0 0.0
    %475 = vmatprep.subr.mxu0 0.0
    %476 = vmatpush1.xpose.msra.mxu0 0.0
    %477 = vmatprep.subr.mxu0 0.0
    %478 = vmatpush1.xpose.msra.mxu0 0.0
    %479 = vmatprep.subr.mxu0 0.0
    %480 = vmatpush1.xpose.msra.mxu0 0.0
    %481 = vmatprep.subr.mxu0 0.0
    %482 = vmatpush1.xpose.msra.mxu0 0.0
    %483 = vmatprep.subr.mxu0 0.0
    %484 = vmatpush1.xpose.msra.mxu0 0.0
    %485 = vmatprep.subr.mxu0 0.0
    %486 = vmatpush1.xpose.msra.mxu0 0.0
    %487 = vmatprep.subr.mxu0 0.0
    %488 = vmatpush1.xpose.msra.mxu0 0.0
    %489 = vmatprep.subr.mxu0 0.0
    %490 = vmatpush1.xpose.msra.mxu0 0.0
    %491 = vmatprep.subr.mxu0 0.0
    %492 = vmatpush1.xpose.msra.mxu0 0.0
    %493 = vmatprep.subr.mxu0 0.0
    %494 = vmatpush1.xpose.msra.mxu0 0.0
    %495 = vmatprep.subr.mxu0 0.0
    %496 = vmatpush1.xpose.msra.mxu0 0.0
    %497 = vmatprep.subr.mxu0 0.0
    %498 = vmatpush1.xpose.msra.mxu0 0.0
    %499 = vmatprep.subr.mxu0 0.0
    %500 = vmatpush1.xpose.msra.mxu0 0.0
    %501 = vmatprep.subr.mxu0 0.0
    %502 = vmatpush1.xpose.msra.mxu0 0.0
    %503 = vmatprep.subr.mxu0 0.0
    %504 = vmatpush1.xpose.msra.mxu0 0.0
    %505 = vmatprep.subr.mxu0 0.0
    %506 = vmatpush1.xpose.msra.mxu0 0.0
    %507 = vmatprep.mubr.f32.mxu0 0.0
    %v508 = vand.u32 %v47, 4294901760
    %509 = vmatmul.mubr.f32.gmra.mrb[0].mxu0 %v508
    %v510 = vpop.f32.mrb[0].mxu0
    %v511 = vadd.f32 %v438, %v510
    %v512 = vpop.f32.mrb[0].mxu0
    %513 = vdwg.mxu0
    %s514 = sld [smem:[#allocation2]]
    %v515 = vstv %s514
    %v516 = vmul.f32 %v515, %v511
    %vm517 = vcmask 130048
    %518 = vst.msk [vmem:[#allocation8] sm:$0xff] %vm517, %v516
    // Predicated region
    $region22: #{tpu_custom_call.1} parent=1 // pred_check
      _
    $region23: #{tpu_custom_call.1} parent=1 // pred_check_branch
      %520 = sbr.rel (0) target = $region25
    $region24: #{tpu_custom_call.1} parent=1 // pred_region
      %s522 = ssub.s32 128, 128
      %523 = vsyncadd [#allocation5], %s522
      %s525 = sshll.u32 [#allocation8], 4
      %s526 = int_to_ptr.vmem [resolvable:$true] %s525
      %528 = dma.vmem_to_hbm [thread:$0]  %s526, 128, %s3, [#allocation5]
    $region25: #{tpu_custom_call.1} parent=1 // pred_fallthru
      _
    // Predicated region
    $region26: #{tpu_custom_call.1} parent=1 // pred_check
      _
    $region27: #{tpu_custom_call.1} parent=1 // pred_check_branch
      %530 = sbr.rel (0) target = $region29
    $region28: #{tpu_custom_call.1} parent=1 // pred_region
      %531 = dma.done [#allocation5], 128
    $region29: #{tpu_custom_call.1} parent=1 // pred_fallthru
      _
    %532 = vsyncpa [#allocation4], 1
    %533 = vsyncpa [#allocation7], 1
    %534 = vsyncpa [#allocation5], 1

</llo_original>
